<compile_context>
chip_gen: v5e
topology: v5e:2x2
jax: 0.10.0
libtpu: 0.0.40
codegen_flags: <defaults>
</compile_context>

<pallas_src>
import functools

import jax
import jax.numpy as jnp
from jax.experimental import pallas as pl
from jax.experimental.pallas import tpu as pltpu


def _round_up(x, m):
    return (x + m - 1) // m * m


# ----------------------------------------------------------------------------
# Pallas kernel: both MLP heads of the Curiosity module in one call.
#   forward_model : Linear(E+A, 256) -> ReLU -> Linear(256, E) -> Tanh
#   inverse_model : Linear(2E, 64)   -> ReLU -> Linear(64, A)  -> LogSigmoid
# ----------------------------------------------------------------------------
def _curiosity_kernel(
    emb_ref,      # [bt, E]   f32  (cast to bf16 in-kernel)
    nemb_ref,     # [bt, E]   f32
    act_ref,      # [bt, 1]   i32 (A>1: class ids) or f32 (A==1: raw action)
    w_emb_ref,    # [E, 320]  bf16  fused [w1[:E] | w3[:E]]
    w1_act_ref,   # [A, 256]  bf16  (w1[E:])
    w3_next_ref,  # [E, 64]   bf16  (w3[E:])
    b1_ref,       # [1, 256]  f32
    b3_ref,       # [1, 64]   f32
    w2_ref,       # [256, E]  bf16
    b2_ref,       # [1, E]    f32
    w4_ref,       # [64, A]   bf16
    b4_ref,       # [1, A]    f32
    next_ref,     # [bt, E]   f32  out: next_obs_pred
    actp_ref,     # [bt, A]   f32  out: action_pred
    *,
    n_actions,
    compute_dtype,
):
    bt, E = emb_ref.shape
    H1 = w1_act_ref.shape[1]      # 256

    emb = emb_ref[...].astype(compute_dtype)
    nemb = nemb_ref[...].astype(compute_dtype)

    # Shared first-layer matmul over the embedding for BOTH heads:
    #   [bt, E] @ [E, 256 + 64] -> [bt, 320] (f32 accumulator)
    fused = jnp.dot(emb, w_emb_ref[...], preferred_element_type=jnp.float32)

    # ---- forward model ----
    if n_actions > 1:
        ids = act_ref[...]                                          # [bt,1] i32
        lanes = jax.lax.broadcasted_iota(jnp.int32, (bt, n_actions), 1)
        act_feat = (lanes == ids).astype(compute_dtype)             # one-hot
    else:
        # TODO(synk): PyTorch uses the raw float action as the feature when
        # n_actions == 1; mirrored here (reshaped to a single column).
        act_feat = act_ref[...].astype(compute_dtype)               # [bt,1]

    h1 = (fused[:, :H1]
          + jnp.dot(act_feat, w1_act_ref[...],
                    preferred_element_type=jnp.float32)
          + b1_ref[...])
    h1 = jnp.maximum(h1, 0.0)                                       # ReLU (f32)
    o1 = jnp.dot(h1.astype(compute_dtype), w2_ref[...],
                 preferred_element_type=jnp.float32) + b2_ref[...]
    next_ref[...] = jnp.tanh(o1)                                    # [bt, E]

    # ---- inverse model ----
    h2 = (fused[:, H1:]
          + jnp.dot(nemb, w3_next_ref[...],
                    preferred_element_type=jnp.float32)
          + b3_ref[...])
    h2 = jnp.maximum(h2, 0.0)                                       # ReLU (f32)
    logits = jnp.dot(h2.astype(compute_dtype), w4_ref[...],
                     preferred_element_type=jnp.float32) + b4_ref[...]
    # numerically stable log-sigmoid == -softplus(-x)
    actp_ref[...] = (jnp.minimum(logits, 0.0)
                     - jnp.log1p(jnp.exp(-jnp.abs(logits))))        # [bt, A]


def prepare_params(params, compute_dtype=jnp.bfloat16):
    """Convert torch-layout ([in, out]) f32 params to the kernel layout:
    fused embedding weight, split action / next-embedding weights, bf16
    matmul operands, f32 biases. Do this once; reuse across forward calls."""
    E = params["w2"].shape[1]                     # embedding size
    w1, w3 = params["w1"], params["w3"]           # [E+A, 256], [2E, 64]
    return dict(
        w_emb=jnp.concatenate([w1[:E], w3[:E]], axis=1).astype(compute_dtype),
        w1_act=w1[E:].astype(compute_dtype),
        w3_next=w3[E:].astype(compute_dtype),
        b1=params["b1"].astype(jnp.float32),
        b3=params["b3"].astype(jnp.float32),
        w2=params["w2"].astype(compute_dtype),
        b2=params["b2"].astype(jnp.float32),
        w4=params["w4"].astype(compute_dtype),
        b4=params["b4"].astype(jnp.float32),
    )


def curiosity_pallas(kparams, embedding, next_embedding, action,
                     next_obs=None, memory=None, *, block_b=2048,
                     compute_dtype=jnp.bfloat16):
    """Mirrors Curiosity.forward; returns [next_embedding, next_obs_pred,
    action_pred]. next_obs and memory are unused (as in the PyTorch module)."""
    B, E = embedding.shape
    A = kparams["w4"].shape[-1]
    H1 = kparams["w1_act"].shape[1]   # 256
    H2 = kparams["w3_next"].shape[1]  # 64

    if A > 1:
        act_in = action.astype(jnp.int32).reshape(B, 1)
    else:
        act_in = action.astype(jnp.float32).reshape(B, 1)

    # Batch tile: rows on sublanes, no wrapper-side padding (ragged last block
    # handled by Pallas). Large tiles amortize per-grid-step overhead; if the
    # whole batch would be one step, halve it so v7x's two TCs both get work.
    if B <= 8:
        bt = B                                 # block == full batch dim
    else:
        bt = min(block_b, (B // 8) * 8)
        if B >= 16 and pl.cdiv(B, bt) < 2:
            bt = max(8, _round_up(pl.cdiv(B, 2), 8))
    nb = pl.cdiv(B, bt)

    def row_spec(width):
        return pl.BlockSpec((bt, width), lambda i: (i, 0))

    def full_spec(arr):
        return pl.BlockSpec(arr.shape, lambda i: (0, 0))

    flops = 2 * B * (E * (H1 + H2) + A * H1 + E * H2 + H1 * E + H2 * A)
    transcendentals = B * (E + 2 * A)
    bytes_accessed = (
        (embedding.size + next_embedding.size) * embedding.dtype.itemsize
        + act_in.size * act_in.dtype.itemsize
        + sum(v.size * v.dtype.itemsize for v in kparams.values())
        + B * (E + A) * 4)

    next_pred, act_pred = pl.pallas_call(
        functools.partial(_curiosity_kernel, n_actions=A,
                          compute_dtype=compute_dtype),
        out_shape=(jax.ShapeDtypeStruct((B, E), jnp.float32),
                   jax.ShapeDtypeStruct((B, A), jnp.float32)),
        grid_spec=pltpu.PrefetchScalarGridSpec(
            num_scalar_prefetch=0,
            grid=(nb,),
            in_specs=[
                row_spec(E), row_spec(E), row_spec(1),
                full_spec(kparams["w_emb"]), full_spec(kparams["w1_act"]),
                full_spec(kparams["w3_next"]),
                full_spec(kparams["b1"]), full_spec(kparams["b3"]),
                full_spec(kparams["w2"]), full_spec(kparams["b2"]),
                full_spec(kparams["w4"]), full_spec(kparams["b4"]),
            ],
            out_specs=(pl.BlockSpec((bt, E), lambda i: (i, 0)),
                       pl.BlockSpec((bt, A), lambda i: (i, 0))),
        ),
        compiler_params=pltpu.CompilerParams(
            dimension_semantics=("parallel",),
        ),
        cost_estimate=pl.CostEstimate(
            flops=flops, transcendentals=transcendentals,
            bytes_accessed=bytes_accessed),
    )(embedding, next_embedding, act_in,
      kparams["w_emb"], kparams["w1_act"], kparams["w3_next"],
      kparams["b1"], kparams["b3"],
      kparams["w2"], kparams["b2"],
      kparams["w4"], kparams["b4"])

    return [next_embedding, next_pred, act_pred]


def init_params(key, embedding_size, n_actions):
    """Deterministic synthetic parameters matching the PyTorch layer shapes.
    Weights stored transposed relative to torch ([in, out]); biases 2-D."""
    ks = jax.random.split(key, 8)

    def lin(kw, kb, fan_in, fan_out):
        scale = 1.0 / jnp.sqrt(jnp.float32(fan_in))
        w = jax.random.uniform(kw, (fan_in, fan_out), jnp.float32,
                               -scale, scale)
        b = jax.random.uniform(kb, (1, fan_out), jnp.float32, -scale, scale)
        return w, b

    w1, b1 = lin(ks[0], ks[1], embedding_size + n_actions, 256)
    w2, b2 = lin(ks[2], ks[3], 256, embedding_size)
    w3, b3 = lin(ks[4], ks[5], embedding_size * 2, 64)
    w4, b4 = lin(ks[6], ks[7], 64, n_actions)
    return dict(w1=w1, b1=b1, w2=w2, b2=b2, w3=w3, b3=b3, w4=w4, b4=b4)


if __name__ == "__main__":
    key = jax.random.PRNGKey(0)
    k_p, k_e, k_ne, k_a = jax.random.split(key, 4)

    batch = 8
    embedding_size = 32
    n_actions = 4

    params = init_params(k_p, embedding_size, n_actions)
    kparams = prepare_params(params)          # fuse/split + bf16 once

    embedding = jax.random.normal(k_e, (batch, embedding_size), jnp.float32)
    next_embedding = jax.random.normal(k_ne, (batch, embedding_size),
                                       jnp.float32)
    action = jax.random.randint(k_a, (batch,), 0, n_actions, jnp.int32)
    # next_obs / memory are accepted but unused by Curiosity.forward
    next_obs = jnp.zeros((batch, 3, 7, 7), jnp.float32)
    memory = jnp.zeros((batch, 64), jnp.float32)

    out = curiosity_pallas(kparams, embedding, next_embedding, action,
                           next_obs, memory)
    out = jax.block_until_ready(out)

    # pure-JAX f32 reference (torch semantics); loose tolerance for the bf16
    # matmul operands used on the MXU.
    def ref_forward():
        a = jax.nn.one_hot(action, n_actions, dtype=jnp.float32)
        fi = jnp.concatenate([embedding, a], axis=1)
        h1 = jnp.maximum(fi @ params["w1"] + params["b1"], 0.0)
        nop = jnp.tanh(h1 @ params["w2"] + params["b2"])
        ii = jnp.concatenate([embedding, next_embedding], axis=1)
        h2 = jnp.maximum(ii @ params["w3"] + params["b3"], 0.0)
        ap = jax.nn.log_sigmoid(h2 @ params["w4"] + params["b4"])
        return nop, ap

    nop_ref, ap_ref = ref_forward()
    assert out[0].shape == (batch, embedding_size)
    assert out[1].shape == (batch, embedding_size)
    assert out[2].shape == (batch, n_actions)
    assert jnp.allclose(out[1], nop_ref, atol=3e-2, rtol=3e-2)
    assert jnp.allclose(out[2], ap_ref, atol=3e-2, rtol=3e-2)

    print("KERNEL_OK")
</pallas_src>

<mosaic_0001>
module attributes {stable_mosaic.version = 11 : i64} {
  func.func @_curiosity_kernel(%arg0: i32, %arg1: memref<8x32xf32, #tpu.memory_space<vmem>>, %arg2: memref<8x32xf32, #tpu.memory_space<vmem>>, %arg3: memref<8x1xi32, #tpu.memory_space<vmem>>, %arg4: memref<32x320xbf16, #tpu.memory_space<vmem>>, %arg5: memref<4x256xbf16, #tpu.memory_space<vmem>>, %arg6: memref<32x64xbf16, #tpu.memory_space<vmem>>, %arg7: memref<1x256xf32, #tpu.memory_space<vmem>>, %arg8: memref<1x64xf32, #tpu.memory_space<vmem>>, %arg9: memref<256x32xbf16, #tpu.memory_space<vmem>>, %arg10: memref<1x32xf32, #tpu.memory_space<vmem>>, %arg11: memref<64x4xbf16, #tpu.memory_space<vmem>>, %arg12: memref<1x4xf32, #tpu.memory_space<vmem>>, %arg13: memref<8x32xf32, #tpu.memory_space<vmem>>, %arg14: memref<8x4xf32, #tpu.memory_space<vmem>>) attributes {dimension_semantics = [#tpu.dimension_semantics<parallel>], iteration_bounds = array<i64: 1>, scalar_prefetch = 0 : i64, scratch_operands = 0 : i64, tpu.core_type = #tpu.core_type<tc>, window_params = [{transform_indices = @transform_0, window_bounds = array<i64: 8, 32>}, {transform_indices = @transform_1, window_bounds = array<i64: 8, 32>}, {transform_indices = @transform_2, window_bounds = array<i64: 8, 1>}, {pipeline_mode = #tpu.pipeline_mode<synchronous>, transform_indices = @transform_3, window_bounds = array<i64: 32, 320>}, {pipeline_mode = #tpu.pipeline_mode<synchronous>, transform_indices = @transform_4, window_bounds = array<i64: 4, 256>}, {pipeline_mode = #tpu.pipeline_mode<synchronous>, transform_indices = @transform_5, window_bounds = array<i64: 32, 64>}, {pipeline_mode = #tpu.pipeline_mode<synchronous>, transform_indices = @transform_6, window_bounds = array<i64: 1, 256>}, {pipeline_mode = #tpu.pipeline_mode<synchronous>, transform_indices = @transform_7, window_bounds = array<i64: 1, 64>}, {pipeline_mode = #tpu.pipeline_mode<synchronous>, transform_indices = @transform_8, window_bounds = array<i64: 256, 32>}, {pipeline_mode = #tpu.pipeline_mode<synchronous>, transform_indices = @transform_9, window_bounds = array<i64: 1, 32>}, {pipeline_mode = #tpu.pipeline_mode<synchronous>, transform_indices = @transform_10, window_bounds = array<i64: 64, 4>}, {pipeline_mode = #tpu.pipeline_mode<synchronous>, transform_indices = @transform_11, window_bounds = array<i64: 1, 4>}, {transform_indices = @transform_12, window_bounds = array<i64: 8, 32>}, {transform_indices = @transform_13, window_bounds = array<i64: 8, 4>}]} {
    %c0 = arith.constant 0 : index
    %c0_0 = arith.constant 0 : index
    %0 = vector.load %arg1[%c0, %c0_0] : memref<8x32xf32, #tpu.memory_space<vmem>>, vector<8x32xf32>
    %1 = arith.truncf %0 : vector<8x32xf32> to vector<8x32xbf16>
    %c0_1 = arith.constant 0 : index
    %c0_2 = arith.constant 0 : index
    %2 = vector.load %arg2[%c0_1, %c0_2] : memref<8x32xf32, #tpu.memory_space<vmem>>, vector<8x32xf32>
    %3 = arith.truncf %2 : vector<8x32xf32> to vector<8x32xbf16>
    %c0_3 = arith.constant 0 : index
    %c0_4 = arith.constant 0 : index
    %4 = vector.load %arg4[%c0_3, %c0_4] : memref<32x320xbf16, #tpu.memory_space<vmem>>, vector<32x320xbf16>
    %cst = arith.constant dense<0.000000e+00> : vector<8x320xf32>
    %5 = tpu.matmul %1, %4, %cst {dimension_numbers = #tpu.dot_dimension_numbers<[1], [0], [0], [1], [0, 0, 1, 1], [], []>} : vector<8x32xbf16>, vector<32x320xbf16>, vector<8x320xf32> -> vector<8x320xf32>
    %c0_5 = arith.constant 0 : index
    %c0_6 = arith.constant 0 : index
    %6 = vector.load %arg3[%c0_5, %c0_6] : memref<8x1xi32, #tpu.memory_space<vmem>>, vector<8x1xi32>
    %7 = tpu.iota {dimensions = array<i32: 1>} : vector<8x4xi32>
    %8 = vector.broadcast %6 : vector<8x1xi32> to vector<8x4xi32>
    %9 = arith.cmpi eq, %7, %8 : vector<8x4xi32>
    %10 = arith.extui %9 : vector<8x4xi1> to vector<8x4xi32>
    %11 = arith.sitofp %10 : vector<8x4xi32> to vector<8x4xf32>
    %12 = arith.truncf %11 : vector<8x4xf32> to vector<8x4xbf16>
    %13 = vector.extract_strided_slice %5 {offsets = [0, 0], sizes = [8, 256], strides = [1, 1]} : vector<8x320xf32> to vector<8x256xf32>
    %c0_7 = arith.constant 0 : index
    %c0_8 = arith.constant 0 : index
    %14 = vector.load %arg5[%c0_7, %c0_8] : memref<4x256xbf16, #tpu.memory_space<vmem>>, vector<4x256xbf16>
    %cst_9 = arith.constant dense<0.000000e+00> : vector<8x256xf32>
    %15 = tpu.matmul %12, %14, %cst_9 {dimension_numbers = #tpu.dot_dimension_numbers<[1], [0], [0], [1], [0, 0, 1, 1], [], []>} : vector<8x4xbf16>, vector<4x256xbf16>, vector<8x256xf32> -> vector<8x256xf32>
    %16 = arith.addf %13, %15 : vector<8x256xf32>
    %c0_10 = arith.constant 0 : index
    %c0_11 = arith.constant 0 : index
    %17 = vector.load %arg7[%c0_10, %c0_11] : memref<1x256xf32, #tpu.memory_space<vmem>>, vector<1x256xf32>
    %18 = vector.broadcast %17 : vector<1x256xf32> to vector<8x256xf32>
    %19 = arith.addf %16, %18 : vector<8x256xf32>
    %cst_12 = arith.constant 0.000000e+00 : f32
    %20 = vector.broadcast %cst_12 : f32 to vector<8x256xf32>
    %21 = arith.maximumf %19, %20 : vector<8x256xf32>
    %22 = arith.truncf %21 : vector<8x256xf32> to vector<8x256xbf16>
    %c0_13 = arith.constant 0 : index
    %c0_14 = arith.constant 0 : index
    %23 = vector.load %arg9[%c0_13, %c0_14] : memref<256x32xbf16, #tpu.memory_space<vmem>>, vector<256x32xbf16>
    %cst_15 = arith.constant dense<0.000000e+00> : vector<8x32xf32>
    %24 = tpu.matmul %22, %23, %cst_15 {dimension_numbers = #tpu.dot_dimension_numbers<[1], [0], [0], [1], [0, 0, 1, 1], [], []>} : vector<8x256xbf16>, vector<256x32xbf16>, vector<8x32xf32> -> vector<8x32xf32>
    %c0_16 = arith.constant 0 : index
    %c0_17 = arith.constant 0 : index
    %25 = vector.load %arg10[%c0_16, %c0_17] : memref<1x32xf32, #tpu.memory_space<vmem>>, vector<1x32xf32>
    %26 = vector.broadcast %25 : vector<1x32xf32> to vector<8x32xf32>
    %27 = arith.addf %24, %26 : vector<8x32xf32>
    %28 = math.tanh %27 : vector<8x32xf32>
    %c0_18 = arith.constant 0 : index
    %c0_19 = arith.constant 0 : index
    %29 = vector.load %arg13[%c0_18, %c0_19] : memref<8x32xf32, #tpu.memory_space<vmem>>, vector<8x32xf32>
    tpu.vector_store %arg13[%c0_18, %c0_19], %28 {strides = array<i32>} : memref<8x32xf32, #tpu.memory_space<vmem>>, vector<8x32xf32>,
    %30 = vector.extract_strided_slice %5 {offsets = [0, 256], sizes = [8, 64], strides = [1, 1]} : vector<8x320xf32> to vector<8x64xf32>
    %c0_20 = arith.constant 0 : index
    %c0_21 = arith.constant 0 : index
    %31 = vector.load %arg6[%c0_20, %c0_21] : memref<32x64xbf16, #tpu.memory_space<vmem>>, vector<32x64xbf16>
    %cst_22 = arith.constant dense<0.000000e+00> : vector<8x64xf32>
    %32 = tpu.matmul %3, %31, %cst_22 {dimension_numbers = #tpu.dot_dimension_numbers<[1], [0], [0], [1], [0, 0, 1, 1], [], []>} : vector<8x32xbf16>, vector<32x64xbf16>, vector<8x64xf32> -> vector<8x64xf32>
    %33 = arith.addf %30, %32 : vector<8x64xf32>
    %c0_23 = arith.constant 0 : index
    %c0_24 = arith.constant 0 : index
    %34 = vector.load %arg8[%c0_23, %c0_24] : memref<1x64xf32, #tpu.memory_space<vmem>>, vector<1x64xf32>
    %35 = vector.broadcast %34 : vector<1x64xf32> to vector<8x64xf32>
    %36 = arith.addf %33, %35 : vector<8x64xf32>
    %cst_25 = arith.constant 0.000000e+00 : f32
    %37 = vector.broadcast %cst_25 : f32 to vector<8x64xf32>
    %38 = arith.maximumf %36, %37 : vector<8x64xf32>
    %39 = arith.truncf %38 : vector<8x64xf32> to vector<8x64xbf16>
    %c0_26 = arith.constant 0 : index
    %c0_27 = arith.constant 0 : index
    %40 = vector.load %arg11[%c0_26, %c0_27] : memref<64x4xbf16, #tpu.memory_space<vmem>>, vector<64x4xbf16>
    %cst_28 = arith.constant dense<0.000000e+00> : vector<8x4xf32>
    %41 = tpu.matmul %39, %40, %cst_28 {dimension_numbers = #tpu.dot_dimension_numbers<[1], [0], [0], [1], [0, 0, 1, 1], [], []>} : vector<8x64xbf16>, vector<64x4xbf16>, vector<8x4xf32> -> vector<8x4xf32>
    %c0_29 = arith.constant 0 : index
    %c0_30 = arith.constant 0 : index
    %42 = vector.load %arg12[%c0_29, %c0_30] : memref<1x4xf32, #tpu.memory_space<vmem>>, vector<1x4xf32>
    %43 = vector.broadcast %42 : vector<1x4xf32> to vector<8x4xf32>
    %44 = arith.addf %41, %43 : vector<8x4xf32>
    %cst_31 = arith.constant 0.000000e+00 : f32
    %45 = vector.broadcast %cst_31 : f32 to vector<8x4xf32>
    %46 = arith.minimumf %44, %45 : vector<8x4xf32>
    %47 = math.absf %44 : vector<8x4xf32>
    %cst_32 = arith.constant 0.000000e+00 : f32
    %48 = vector.broadcast %cst_32 : f32 to vector<8x4xf32>
    %49 = arith.subf %48, %47 : vector<8x4xf32>
    %50 = math.exp %49 : vector<8x4xf32>
    %51 = math.log1p %50 : vector<8x4xf32>
    %52 = arith.subf %46, %51 : vector<8x4xf32>
    %c0_33 = arith.constant 0 : index
    %c0_34 = arith.constant 0 : index
    %53 = vector.load %arg14[%c0_33, %c0_34] : memref<8x4xf32, #tpu.memory_space<vmem>>, vector<8x4xf32>
    tpu.vector_store %arg14[%c0_33, %c0_34], %52 {strides = array<i32>} : memref<8x4xf32, #tpu.memory_space<vmem>>, vector<8x4xf32>,
    return
  }
  func.func @transform_0(%arg0: i32) -> (i32, i32) {
    %c0_i32 = arith.constant 0 : i32
    %c0_i32_0 = arith.constant 0 : i32
    return %arg0, %c0_i32 : i32, i32
  }
  func.func @transform_1(%arg0: i32) -> (i32, i32) {
    %c0_i32 = arith.constant 0 : i32
    %c0_i32_0 = arith.constant 0 : i32
    return %arg0, %c0_i32 : i32, i32
  }
  func.func @transform_2(%arg0: i32) -> (i32, i32) {
    %c0_i32 = arith.constant 0 : i32
    %c0_i32_0 = arith.constant 0 : i32
    return %arg0, %c0_i32 : i32, i32
  }
  func.func @transform_3(%arg0: i32) -> (i32, i32) {
    %c0_i32 = arith.constant 0 : i32
    %c0_i32_0 = arith.constant 0 : i32
    %c0_i32_1 = arith.constant 0 : i32
    return %c0_i32, %c0_i32_0 : i32, i32
  }
  func.func @transform_4(%arg0: i32) -> (i32, i32) {
    %c0_i32 = arith.constant 0 : i32
    %c0_i32_0 = arith.constant 0 : i32
    %c0_i32_1 = arith.constant 0 : i32
    return %c0_i32, %c0_i32_0 : i32, i32
  }
  func.func @transform_5(%arg0: i32) -> (i32, i32) {
    %c0_i32 = arith.constant 0 : i32
    %c0_i32_0 = arith.constant 0 : i32
    %c0_i32_1 = arith.constant 0 : i32
    return %c0_i32, %c0_i32_0 : i32, i32
  }
  func.func @transform_6(%arg0: i32) -> (i32, i32) {
    %c0_i32 = arith.constant 0 : i32
    %c0_i32_0 = arith.constant 0 : i32
    %c0_i32_1 = arith.constant 0 : i32
    return %c0_i32, %c0_i32_0 : i32, i32
  }
  func.func @transform_7(%arg0: i32) -> (i32, i32) {
    %c0_i32 = arith.constant 0 : i32
    %c0_i32_0 = arith.constant 0 : i32
    %c0_i32_1 = arith.constant 0 : i32
    return %c0_i32, %c0_i32_0 : i32, i32
  }
  func.func @transform_8(%arg0: i32) -> (i32, i32) {
    %c0_i32 = arith.constant 0 : i32
    %c0_i32_0 = arith.constant 0 : i32
    %c0_i32_1 = arith.constant 0 : i32
    return %c0_i32, %c0_i32_0 : i32, i32
  }
  func.func @transform_9(%arg0: i32) -> (i32, i32) {
    %c0_i32 = arith.constant 0 : i32
    %c0_i32_0 = arith.constant 0 : i32
    %c0_i32_1 = arith.constant 0 : i32
    return %c0_i32, %c0_i32_0 : i32, i32
  }
  func.func @transform_10(%arg0: i32) -> (i32, i32) {
    %c0_i32 = arith.constant 0 : i32
    %c0_i32_0 = arith.constant 0 : i32
    %c0_i32_1 = arith.constant 0 : i32
    return %c0_i32, %c0_i32_0 : i32, i32
  }
  func.func @transform_11(%arg0: i32) -> (i32, i32) {
    %c0_i32 = arith.constant 0 : i32
    %c0_i32_0 = arith.constant 0 : i32
    %c0_i32_1 = arith.constant 0 : i32
    return %c0_i32, %c0_i32_0 : i32, i32
  }
  func.func @transform_12(%arg0: i32) -> (i32, i32) {
    %c0_i32 = arith.constant 0 : i32
    %c0_i32_0 = arith.constant 0 : i32
    return %arg0, %c0_i32 : i32, i32
  }
  func.func @transform_13(%arg0: i32) -> (i32, i32) {
    %c0_i32 = arith.constant 0 : i32
    %c0_i32_0 = arith.constant 0 : i32
    return %arg0, %c0_i32 : i32, i32
  }
}

</mosaic_0001>

<llo_original>
// kernel: tpu_custom_call.1
$region0: #{tpu_custom_call.1}
  #allocation0 [shape = 'u32[]', space=smem, size = 0x4, offset = 0x4, fixed_abs, tag = 'smem constant byte address 0x4 - core index']
  #allocation1 [shape = 'u32[72,128]{1,0:T(1,128)}', space=vmem, size = 0x9000, scoped, tag = 'internal scratch']
  %s0 = inlined_call_operand.vmem [shape: f32[8,32], index: 0, kind: input, shape index: {}]
  %s1 = inlined_call_operand.vmem [shape: f32[8,32], index: 1, kind: input, shape index: {}]
  %s2 = inlined_call_operand.vmem [shape: s32[8,1], index: 2, kind: input, shape index: {}]
  %s3 = inlined_call_operand.vmem [shape: bf16[32,320], index: 3, kind: input, shape index: {}]
  %s4 = inlined_call_operand.vmem [shape: bf16[4,256], index: 4, kind: input, shape index: {}]
  %s5 = inlined_call_operand.vmem [shape: bf16[32,64], index: 5, kind: input, shape index: {}]
  %s6 = inlined_call_operand.vmem [shape: f32[1,256], index: 6, kind: input, shape index: {}]
  %s7 = inlined_call_operand.vmem [shape: f32[1,64], index: 7, kind: input, shape index: {}]
  %s8 = inlined_call_operand.vmem [shape: bf16[256,32], index: 8, kind: input, shape index: {}]
  %s9 = inlined_call_operand.vmem [shape: f32[1,32], index: 9, kind: input, shape index: {}]
  %s10 = inlined_call_operand.vmem [shape: bf16[64,4], index: 10, kind: input, shape index: {}]
  %s11 = inlined_call_operand.vmem [shape: f32[1,4], index: 11, kind: input, shape index: {}]
  %s12 = inlined_call_operand.hbm [shape: f32[8,32], index: 12, kind: output, shape index: {0}]
  %s13 = inlined_call_operand.vmem [shape: f32[8,4], index: 13, kind: output, shape index: {1}]
  %14 = xla_tuple %s12, %s13
  %s15 = sld [smem:[#allocation0]]
  $region66: #{tpu_custom_call.1} parent=0
    _
  %s17 = ssub.s32 1, %s15
  %s18 = scalar_select 0, %s17, %s15
  $region1: #{tpu_custom_call.1} parent=0
    #allocation2 [shape = 'u8[4096]{0}', space=vmem, size = 0x1000, scoped, tag = 'output window, operand 0, single buffered']
    #allocation3 [shape = 's32[1]{0}', space=sflag, size = 0x4, scoped, tag = 'scoped memory for tpu_custom_call.1']
    %19 = vsyncpa [#allocation3], 0
    // Predicated region
    $region2: #{tpu_custom_call.1} parent=1 // pred_check
      _
    $region3: #{tpu_custom_call.1} parent=1 // pred_check_branch
      %21 = sbr.rel (0) target = $region5
    $region4: #{tpu_custom_call.1} parent=1 // pred_region
      _
    $region5: #{tpu_custom_call.1} parent=1 // pred_fallthru
      _
    // Predicated region
    $region6: #{tpu_custom_call.1} parent=1 // pred_check
      _
    $region7: #{tpu_custom_call.1} parent=1 // pred_check_branch
      %23 = sbr.rel (0) target = $region9
    $region8: #{tpu_custom_call.1} parent=1 // pred_region
      _
    $region9: #{tpu_custom_call.1} parent=1 // pred_fallthru
      _
    // Predicated region
    $region10: #{tpu_custom_call.1} parent=1 // pred_check
      _
    $region11: #{tpu_custom_call.1} parent=1 // pred_check_branch
      %25 = sbr.rel (0) target = $region13
    $region12: #{tpu_custom_call.1} parent=1 // pred_region
      _
    $region13: #{tpu_custom_call.1} parent=1 // pred_fallthru
      _
    // Predicated region
    $region14: #{tpu_custom_call.1} parent=1 // pred_check
      _
    $region15: #{tpu_custom_call.1} parent=1 // pred_check_branch
      %27 = sbr.rel (0) target = $region17
    $region16: #{tpu_custom_call.1} parent=1 // pred_region
      _
    $region17: #{tpu_custom_call.1} parent=1 // pred_fallthru
      _
    // Predicated region
    $region18: #{tpu_custom_call.1} parent=1 // pred_check
      _
    $region19: #{tpu_custom_call.1} parent=1 // pred_check_branch
      %29 = sbr.rel (0) target = $region21
    $region20: #{tpu_custom_call.1} parent=1 // pred_region
      _
    $region21: #{tpu_custom_call.1} parent=1 // pred_fallthru
      _
    // Predicated region
    $region22: #{tpu_custom_call.1} parent=1 // pred_check
      _
    $region23: #{tpu_custom_call.1} parent=1 // pred_check_branch
      %31 = sbr.rel (0) target = $region25
    $region24: #{tpu_custom_call.1} parent=1 // pred_region
      _
    $region25: #{tpu_custom_call.1} parent=1 // pred_fallthru
      _
    // Predicated region
    $region26: #{tpu_custom_call.1} parent=1 // pred_check
      _
    $region27: #{tpu_custom_call.1} parent=1 // pred_check_branch
      %33 = sbr.rel (0) target = $region29
    $region28: #{tpu_custom_call.1} parent=1 // pred_region
      _
    $region29: #{tpu_custom_call.1} parent=1 // pred_fallthru
      _
    // Predicated region
    $region30: #{tpu_custom_call.1} parent=1 // pred_check
      _
    $region31: #{tpu_custom_call.1} parent=1 // pred_check_branch
      %35 = sbr.rel (0) target = $region33
    $region32: #{tpu_custom_call.1} parent=1 // pred_region
      _
    $region33: #{tpu_custom_call.1} parent=1 // pred_fallthru
      _
    // Predicated region
    $region34: #{tpu_custom_call.1} parent=1 // pred_check
      _
    $region35: #{tpu_custom_call.1} parent=1 // pred_check_branch
      %37 = sbr.rel (0) target = $region37
    $region36: #{tpu_custom_call.1} parent=1 // pred_region
      _
    $region37: #{tpu_custom_call.1} parent=1 // pred_fallthru
      _
    // Predicated region
    $region38: #{tpu_custom_call.1} parent=1 // pred_check
      _
    $region39: #{tpu_custom_call.1} parent=1 // pred_check_branch
      %39 = sbr.rel (0) target = $region41
    $region40: #{tpu_custom_call.1} parent=1 // pred_region
      _
    $region41: #{tpu_custom_call.1} parent=1 // pred_fallthru
      _
    // Predicated region
    $region42: #{tpu_custom_call.1} parent=1 // pred_check
      _
    $region43: #{tpu_custom_call.1} parent=1 // pred_check_branch
      %41 = sbr.rel (0) target = $region45
    $region44: #{tpu_custom_call.1} parent=1 // pred_region
      _
    $region45: #{tpu_custom_call.1} parent=1 // pred_fallthru
      _
    // Predicated region
    $region46: #{tpu_custom_call.1} parent=1 // pred_check
      _
    $region47: #{tpu_custom_call.1} parent=1 // pred_check_branch
      %43 = sbr.rel (0) target = $region49
    $region48: #{tpu_custom_call.1} parent=1 // pred_region
      _
    $region49: #{tpu_custom_call.1} parent=1 // pred_fallthru
      _
    %v45 = vld [vmem:[%s0] sm:$0xff]
    %v46 = vpack.c.bf16 %v45, %v45
    %v47 = vld [vmem:[%s1] sm:$0xff]
    %v48 = vpack.c.bf16 %v47, %v47
    %v49 = vld [vmem:[%s3] sm:$0xff]
    %v50 = vld [vmem:[%s3 + $0x8] sm:$0xf]
    %v51 = vld [vmem:[%s3 + $0xc] sm:$0xff]
    %v52 = vld [vmem:[%s3 + $0x14] sm:$0xf]
    %v53 = vld [vmem:[%s3 + $0x18] sm:$0xff]
    %v54 = vld [vmem:[%s3 + $0x20] sm:$0xf]
    %v55 = vld [vmem:[%s3 + $0x24] sm:$0xff]
    %v56 = vld [vmem:[%s3 + $0x2c] sm:$0xf]
    %v65 = vunpack.c.l.b16 %v49
    %v66 = vunpack.c.h.b16 %v49
    %v67 = vunpack.c.l.b16 %v50
    %v68 = vunpack.c.l.b16 %v51
    %v69 = vunpack.c.h.b16 %v51
    %v70 = vunpack.c.l.b16 %v52
    %v71 = vunpack.c.l.b16 %v53
    %v72 = vunpack.c.h.b16 %v53
    %v73 = vunpack.c.l.b16 %v54
    %v74 = vunpack.c.l.b16 %v55
    %v75 = vunpack.c.h.b16 %v55
    %v76 = vunpack.c.l.b16 %v56
    %v77 = vpack.c.b16 %v68, %v65
    %v78 = vpack.c.b16 %v69, %v66
    %v79 = vpack.c.b16 %v70, %v67
    %v80 = vpack.c.b16 %v74, %v71
    %v81 = vpack.c.b16 %v75, %v72
    %v82 = vpack.c.b16 %v76, %v73
    %vm89 = vcmask 261120
    %v91 = vsel %vm89, %v46, 0
    %93 = vmatpush.bf16.msra.mxu0 0
    %94 = vmatpush.bf16.msra.mxu0 0
    %95 = vmatpush.bf16.msra.mxu0 0
    %96 = vmatpush.bf16.msra.mxu0 0
    %97 = vmatpush.bf16.msra.mxu0 0
    %98 = vmatpush.bf16.msra.mxu0 0
    %99 = vmatpush.bf16.msra.mxu0 %v80
    %100 = vmatpush.bf16.msra.mxu0 %v77
    %101 = vmatmul.bf16.gmra.mxu0 %v91
    %v102 = vpop.f32.mrf.mxu0
    %v103 = vadd.f32 0.0, %v102
    %v104 = vpop.f32.mrf.mxu0
    %105 = vdwg.mxu0
    %106 = vmatpush.bf16.msra.mxu0 0
    %107 = vmatpush.bf16.msra.mxu0 0
    %108 = vmatpush.bf16.msra.mxu0 0
    %109 = vmatpush.bf16.msra.mxu0 0
    %110 = vmatpush.bf16.msra.mxu0 0
    %111 = vmatpush.bf16.msra.mxu0 0
    %112 = vmatpush.bf16.msra.mxu0 %v81
    %113 = vmatpush.bf16.msra.mxu0 %v78
    %114 = vmatmul.bf16.gmra.mxu0 %v91
    %v115 = vpop.f32.mrf.mxu0
    %v116 = vadd.f32 0.0, %v115
    %v117 = vpop.f32.mrf.mxu0
    %118 = vdwg.mxu0
    %119 = vmatpush.bf16.msra.mxu0 0
    %120 = vmatpush.bf16.msra.mxu0 0
    %121 = vmatpush.bf16.msra.mxu0 0
    %122 = vmatpush.bf16.msra.mxu0 0
    %123 = vmatpush.bf16.msra.mxu0 0
    %124 = vmatpush.bf16.msra.mxu0 0
    %125 = vmatpush.bf16.msra.mxu0 %v82
    %126 = vmatpush.bf16.msra.mxu0 %v79
    %127 = vmatmul.bf16.gmra.mxu0 %v91
    %v128 = vpop.f32.mrf.mxu0
    %v129 = vadd.f32 0.0, %v128
    %v130 = vpop.f32.mrf.mxu0
    %131 = vdwg.mxu0
    %v132 = vld [vmem:[%s2] sm:$0xff]
    %v133 = vlaneseq
    %v134 = vand.u32 %v133, 127
    %135 = vset.pattern.permute.xlu0 0
    %136 = vperm.xlu0 %135, %v132
    %v137 = vpop.permute.xlu0 %136
    %vm138 = vcmp.eq.s32.totalorder %v134, %v137
    %v139 = vsel %vm138, 1, 0
    %v140 = vcvt.s32.f32 %v139
    %v141 = vpack.c.bf16 %v140, %v140
    %v142 = vld [vmem:[%s4] sm:$0xf]
    %144 = vst [vmem:[#allocation1] ss:$4 sm:$0xff] %v142
    %v145 = vld.sshfl [vmem:[#allocation1] sm:$0xff pattern:$0x73625140]
    %v146 = vld.sshfl [vmem:[#allocation1 + $0x8] sm:$0xff pattern:$0x73625140]
    %vm147 = vcmask 31744
    %v149 = vsel %vm147, %v141, 0
    %vm151 = vcmask 1041408
    %v152 = vsel %vm151, %v145, 0
    %v154 = vsel %vm151, %v146, 0
    %156 = vmatpush.bf16.msra.mxu0 0
    %157 = vmatpush.bf16.msra.mxu0 0
    %158 = vmatpush.bf16.msra.mxu0 0
    %159 = vmatpush.bf16.msra.mxu0 0
    %160 = vmatpush.bf16.msra.mxu0 0
    %161 = vmatpush.bf16.msra.mxu0 0
    %162 = vmatpush.bf16.msra.mxu0 0
    %163 = vmatpush.bf16.msra.mxu0 %v152
    %164 = vmatmul.bf16.gmra.mxu0 %v149
    %v165 = vpop.f32.mrf.mxu0
    %v166 = vadd.f32 0.0, %v165
    %v167 = vpop.f32.mrf.mxu0
    %168 = vdwg.mxu0
    %169 = vmatpush.bf16.msra.mxu0 0
    %170 = vmatpush.bf16.msra.mxu0 0
    %171 = vmatpush.bf16.msra.mxu0 0
    %172 = vmatpush.bf16.msra.mxu0 0
    %173 = vmatpush.bf16.msra.mxu0 0
    %174 = vmatpush.bf16.msra.mxu0 0
    %175 = vmatpush.bf16.msra.mxu0 0
    %176 = vmatpush.bf16.msra.mxu0 %v154
    %177 = vmatmul.bf16.gmra.mxu0 %v149
    %v178 = vpop.f32.mrf.mxu0
    %v179 = vadd.f32 0.0, %v178
    %v180 = vpop.f32.mrf.mxu0
    %181 = vdwg.mxu0
    %v182 = vadd.f32 %v103, %v166
    %v183 = vadd.f32 %v116, %v179
    %v184 = vld [vmem:[%s6] sm:$0x3]
    %v186 = vperm.slane %v184, 0
    %v187 = vperm.slane %v184, 1
    %v190 = vadd.f32 %v182, %v186
    %v191 = vadd.f32 %v183, %v187
    %v192 = vmax.f32 %v190, 0.0
    %v193 = vmax.f32 %v191, 0.0
    %v194 = vpack.c.bf16 %v192, %v192
    %v195 = vpack.c.bf16 %v193, %v193
    %v196 = vld [vmem:[%s8] sm:$0xf]
    %v197 = vld [vmem:[%s8 + $0x4] sm:$0xf]
    %v198 = vld [vmem:[%s8 + $0x8] sm:$0xf]
    %v199 = vld [vmem:[%s8 + $0xc] sm:$0xf]
    %v200 = vld [vmem:[%s8 + $0x10] sm:$0xf]
    %v201 = vld [vmem:[%s8 + $0x14] sm:$0xf]
    %v202 = vld [vmem:[%s8 + $0x18] sm:$0xf]
    %v203 = vld [vmem:[%s8 + $0x1c] sm:$0xf]
    %v204 = vld [vmem:[%s8 + $0x20] sm:$0xf]
    %v205 = vld [vmem:[%s8 + $0x24] sm:$0xf]
    %v206 = vld [vmem:[%s8 + $0x28] sm:$0xf]
    %v207 = vld [vmem:[%s8 + $0x2c] sm:$0xf]
    %v208 = vld [vmem:[%s8 + $0x30] sm:$0xf]
    %v209 = vld [vmem:[%s8 + $0x34] sm:$0xf]
    %v210 = vld [vmem:[%s8 + $0x38] sm:$0xf]
    %v211 = vld [vmem:[%s8 + $0x3c] sm:$0xf]
    %v212 = vld [vmem:[%s8 + $0x40] sm:$0xf]
    %v213 = vld [vmem:[%s8 + $0x44] sm:$0xf]
    %v214 = vld [vmem:[%s8 + $0x48] sm:$0xf]
    %v215 = vld [vmem:[%s8 + $0x4c] sm:$0xf]
    %v216 = vld [vmem:[%s8 + $0x50] sm:$0xf]
    %v217 = vld [vmem:[%s8 + $0x54] sm:$0xf]
    %v218 = vld [vmem:[%s8 + $0x58] sm:$0xf]
    %v219 = vld [vmem:[%s8 + $0x5c] sm:$0xf]
    %v220 = vld [vmem:[%s8 + $0x60] sm:$0xf]
    %v221 = vld [vmem:[%s8 + $0x64] sm:$0xf]
    %v222 = vld [vmem:[%s8 + $0x68] sm:$0xf]
    %v223 = vld [vmem:[%s8 + $0x6c] sm:$0xf]
    %v224 = vld [vmem:[%s8 + $0x70] sm:$0xf]
    %v225 = vld [vmem:[%s8 + $0x74] sm:$0xf]
    %v226 = vld [vmem:[%s8 + $0x78] sm:$0xf]
    %v227 = vld [vmem:[%s8 + $0x7c] sm:$0xf]
    %v228 = vld [vmem:[%s9] sm:$0x1]
    %v230 = vperm.slane %v228, 0
    %v264 = vunpack.c.l.b16 %v196
    %v265 = vunpack.c.l.b16 %v197
    %v266 = vunpack.c.l.b16 %v198
    %v267 = vunpack.c.l.b16 %v199
    %v268 = vunpack.c.l.b16 %v200
    %v269 = vunpack.c.l.b16 %v201
    %v270 = vunpack.c.l.b16 %v202
    %v271 = vunpack.c.l.b16 %v203
    %v272 = vunpack.c.l.b16 %v204
    %v273 = vunpack.c.l.b16 %v205
    %v274 = vunpack.c.l.b16 %v206
    %v275 = vunpack.c.l.b16 %v207
    %v276 = vunpack.c.l.b16 %v208
    %v277 = vunpack.c.l.b16 %v209
    %v278 = vunpack.c.l.b16 %v210
    %v279 = vunpack.c.l.b16 %v211
    %v280 = vunpack.c.l.b16 %v212
    %v281 = vunpack.c.l.b16 %v213
    %v282 = vunpack.c.l.b16 %v214
    %v283 = vunpack.c.l.b16 %v215
    %v284 = vunpack.c.l.b16 %v216
    %v285 = vunpack.c.l.b16 %v217
    %v286 = vunpack.c.l.b16 %v218
    %v287 = vunpack.c.l.b16 %v219
    %v288 = vunpack.c.l.b16 %v220
    %v289 = vunpack.c.l.b16 %v221
    %v290 = vunpack.c.l.b16 %v222
    %v291 = vunpack.c.l.b16 %v223
    %v292 = vunpack.c.l.b16 %v224
    %v293 = vunpack.c.l.b16 %v225
    %v294 = vunpack.c.l.b16 %v226
    %v295 = vunpack.c.l.b16 %v227
    %v296 = vpack.c.b16 %v265, %v264
    %v297 = vpack.c.b16 %v267, %v266
    %v298 = vpack.c.b16 %v269, %v268
    %v299 = vpack.c.b16 %v271, %v270
    %v300 = vpack.c.b16 %v273, %v272
    %v301 = vpack.c.b16 %v275, %v274
    %v302 = vpack.c.b16 %v277, %v276
    %v303 = vpack.c.b16 %v279, %v278
    %v304 = vpack.c.b16 %v281, %v280
    %v305 = vpack.c.b16 %v283, %v282
    %v306 = vpack.c.b16 %v285, %v284
    %v307 = vpack.c.b16 %v287, %v286
    %v308 = vpack.c.b16 %v289, %v288
    %v309 = vpack.c.b16 %v291, %v290
    %v310 = vpack.c.b16 %v293, %v292
    %v311 = vpack.c.b16 %v295, %v294
    %328 = vmatpush.bf16.msra.mxu0 %v303
    %329 = vmatpush.bf16.msra.mxu0 %v302
    %330 = vmatpush.bf16.msra.mxu0 %v301
    %331 = vmatpush.bf16.msra.mxu0 %v300
    %332 = vmatpush.bf16.msra.mxu0 %v299
    %333 = vmatpush.bf16.msra.mxu0 %v298
    %334 = vmatpush.bf16.msra.mxu0 %v297
    %335 = vmatpush.bf16.msra.mxu0 %v296
    %336 = vmatmul.bf16.gmra.mxu0 %v194
    %v337 = vpop.f32.mrf.mxu0
    %v338 = vadd.f32 %v230, %v337
    %v339 = vpop.f32.mrf.mxu0
    %340 = vdwg.mxu0
    %341 = vmatpush.bf16.msra.mxu0 %v311
    %342 = vmatpush.bf16.msra.mxu0 %v310
    %343 = vmatpush.bf16.msra.mxu0 %v309
    %344 = vmatpush.bf16.msra.mxu0 %v308
    %345 = vmatpush.bf16.msra.mxu0 %v307
    %346 = vmatpush.bf16.msra.mxu0 %v306
    %347 = vmatpush.bf16.msra.mxu0 %v305
    %348 = vmatpush.bf16.msra.mxu0 %v304
    %349 = vmatmul.bf16.gmra.mxu0 %v195
    %v350 = vpop.f32.mrf.mxu0
    %v351 = vadd.f32 %v338, %v350
    %v352 = vpop.f32.mrf.mxu0
    %353 = vdwg.mxu0
    %v354 = vtanh.pop %v351
    %355 = vst.msk [vmem:[#allocation2] sm:$0xff] %vm89, %v354
    %v356 = vld [vmem:[%s5] sm:$0xf]
    %v357 = vld [vmem:[%s5 + $0x4] sm:$0xf]
    %v358 = vld [vmem:[%s5 + $0x8] sm:$0xf]
    %v359 = vld [vmem:[%s5 + $0xc] sm:$0xf]
    %v364 = vunpack.c.l.b16 %v356
    %v365 = vunpack.c.l.b16 %v357
    %v366 = vunpack.c.l.b16 %v358
    %v367 = vunpack.c.l.b16 %v359
    %v368 = vpack.c.b16 %v365, %v364
    %v369 = vpack.c.b16 %v367, %v366
    %v373 = vsel %vm89, %v48, 0
    %375 = vmatpush.bf16.msra.mxu0 0
    %376 = vmatpush.bf16.msra.mxu0 0
    %377 = vmatpush.bf16.msra.mxu0 0
    %378 = vmatpush.bf16.msra.mxu0 0
    %379 = vmatpush.bf16.msra.mxu0 0
    %380 = vmatpush.bf16.msra.mxu0 0
    %381 = vmatpush.bf16.msra.mxu0 %v369
    %382 = vmatpush.bf16.msra.mxu0 %v368
    %383 = vmatmul.bf16.gmra.mxu0 %v373
    %v384 = vpop.f32.mrf.mxu0
    %v385 = vadd.f32 0.0, %v384
    %v386 = vpop.f32.mrf.mxu0
    %387 = vdwg.mxu0
    %v388 = vadd.f32 %v129, %v385
    %v389 = vld [vmem:[%s7] sm:$0x1]
    %v391 = vperm.slane %v389, 0
    %v393 = vadd.f32 %v388, %v391
    %v394 = vmax.f32 %v393, 0.0
    %v395 = vpack.c.bf16 %v394, %v394
    %v396 = vld [vmem:[%s10] sm:$0xf]
    %v397 = vld [vmem:[%s10 + $0x4] sm:$0xf]
    %v398 = vld [vmem:[%s10 + $0x8] sm:$0xf]
    %v399 = vld [vmem:[%s10 + $0xc] sm:$0xf]
    %v400 = vld [vmem:[%s10 + $0x10] sm:$0xf]
    %v401 = vld [vmem:[%s10 + $0x14] sm:$0xf]
    %v402 = vld [vmem:[%s10 + $0x18] sm:$0xf]
    %v403 = vld [vmem:[%s10 + $0x1c] sm:$0xf]
    %v404 = vld [vmem:[%s11] sm:$0x1]
    %v406 = vperm.slane %v404, 0
    %v416 = vunpack.c.l.b16 %v396
    %v417 = vunpack.c.l.b16 %v397
    %v418 = vunpack.c.l.b16 %v398
    %v419 = vunpack.c.l.b16 %v399
    %v420 = vunpack.c.l.b16 %v400
    %v421 = vunpack.c.l.b16 %v401
    %v422 = vunpack.c.l.b16 %v402
    %v423 = vunpack.c.l.b16 %v403
    %v424 = vpack.c.b16 %v417, %v416
    %v425 = vpack.c.b16 %v419, %v418
    %v426 = vpack.c.b16 %v421, %v420
    %v427 = vpack.c.b16 %v423, %v422
    %vm432 = vcmask 523264
    %v434 = vsel %vm432, %v395, 0
    %436 = vmatpush.bf16.msra.mxu0 0
    %437 = vmatpush.bf16.msra.mxu0 0
    %438 = vmatpush.bf16.msra.mxu0 0
    %439 = vmatpush.bf16.msra.mxu0 0
    %440 = vmatpush.bf16.msra.mxu0 %v427
    %441 = vmatpush.bf16.msra.mxu0 %v426
    %442 = vmatpush.bf16.msra.mxu0 %v425
    %443 = vmatpush.bf16.msra.mxu0 %v424
    %444 = vmatmul.bf16.gmra.mxu0 %v434
    %v445 = vpop.f32.mrf.mxu0
    %v446 = vadd.f32 %v406, %v445
    %v447 = vpop.f32.mrf.mxu0
    %448 = vdwg.mxu0
    %v449 = vmin.f32 %v446, 0.0
    %v450 = vand.u32 2147483647, %v446
    %v451 = vsub.f32 0.0, %v450
    %v452 = vmul.f32 %v451, 1.442695
    %v453 = vpow.pop %v452
    %v454 = vadd.f32 %v453, 1.0
    %v455 = vlog2.pop %v454
    %v456 = vmul.f32 %v455, 0.6931472
    %v457 = vmul.f32 -0.5, %v453
    %v458 = vadd.f32 %v457, 1.0
    %v459 = vmul.f32 %v458, %v453
    %v460 = vand.u32 2147483647, %v453
    %vm461 = vcmp.lt.f32.partialorder %v460, 0.0004427343
    %v462 = vsel %vm461, %v459, %v456
    %v463 = vsub.f32 %v449, %v462
    %464 = vst.msk [vmem:[%s13] sm:$0xff] %vm147, %v463
    // Predicated region
    $region50: #{tpu_custom_call.1} parent=1 // pred_check
      _
    $region51: #{tpu_custom_call.1} parent=1 // pred_check_branch
      %466 = sbr.rel (0) target = $region53
    $region52: #{tpu_custom_call.1} parent=1 // pred_region
      %468 = vsyncadd [#allocation3], 0
      %s470 = sshll.u32 [#allocation2], 4
      %s471 = int_to_ptr.vmem [resolvable:$true] %s470
      %s472 = sshll.u32 %s12, 4
      %s473 = int_to_ptr.hbm [resolvable:$true] %s472
      %475 = dma.vmem_to_hbm [thread:$0]  %s471, 128, %s473, [#allocation3]
    $region53: #{tpu_custom_call.1} parent=1 // pred_fallthru
      _
    // Predicated region
    $region54: #{tpu_custom_call.1} parent=1 // pred_check
      _
    $region55: #{tpu_custom_call.1} parent=1 // pred_check_branch
      %477 = sbr.rel (0) target = $region57
    $region56: #{tpu_custom_call.1} parent=1 // pred_region
      _
    $region57: #{tpu_custom_call.1} parent=1 // pred_fallthru
      _
    // Predicated region
    $region58: #{tpu_custom_call.1} parent=1 // pred_check
      _
    $region59: #{tpu_custom_call.1} parent=1 // pred_check_branch
      %479 = sbr.rel (0) target = $region61
    $region60: #{tpu_custom_call.1} parent=1 // pred_region
      %481 = dma.done [#allocation3], 128
    $region61: #{tpu_custom_call.1} parent=1 // pred_fallthru
      _
    // Predicated region
    $region62: #{tpu_custom_call.1} parent=1 // pred_check
      _
    $region63: #{tpu_custom_call.1} parent=1 // pred_check_branch
      %483 = sbr.rel (0) target = $region65
    $region64: #{tpu_custom_call.1} parent=1 // pred_region
      _
    $region65: #{tpu_custom_call.1} parent=1 // pred_fallthru
      _
    %484 = vsyncpa [#allocation3], 1

</llo_original>
